<compile_context>
chip_gen: v7x
topology: tpu7x:2x2x1
jax: 0.10.0
libtpu: 0.0.40
codegen_flags: <defaults>
</compile_context>

<pallas_src>
import functools

import numpy as np
import jax
import jax.numpy as jnp
from jax import lax
from jax.experimental import pallas as pl
from jax.experimental.pallas import tpu as pltpu

EPS = 1e-5
VMEM_LIMIT = 32 * 1024 * 1024


def round_up(x, m):
    return (x + m - 1) // m * m


# ---------------------------------------------------------------------------
# Kernel 1: fused matmul  y = [relu]( x @ w + bias [+ res] )
#   Used for the 1x1 conv and for ConvTranspose2d(k=2, s=2) (pre-shuffle).
#   x is cast to bf16 inside the kernel (MXU inputs); accumulation is f32.
# ---------------------------------------------------------------------------
def _mm_kernel_single_k(has_res, relu):
    """K fits in one block: exactly one store of the finished output tile."""
    def kernel(*refs):
        if has_res:
            x_ref, w_ref, b_ref, r_ref, o_ref = refs
        else:
            x_ref, w_ref, b_ref, o_ref = refs
            r_ref = None
        y = jnp.dot(x_ref[...].astype(jnp.bfloat16), w_ref[...],
                    preferred_element_type=jnp.float32)
        y = y + b_ref[...]
        if has_res:
            y = y + r_ref[...].astype(jnp.float32)
        if relu:
            y = jnp.maximum(y, 0.0)
        o_ref[...] = y.astype(o_ref.dtype)
    return kernel


def _mm_kernel_multi_k(has_res, relu):
    """K-tiled fallback: f32 scratch accumulator, first partial written
    directly (no zero-init store), output stored once at the last K step."""
    def kernel(*refs):
        if has_res:
            x_ref, w_ref, b_ref, r_ref, o_ref, acc_ref = refs
        else:
            x_ref, w_ref, b_ref, o_ref, acc_ref = refs
            r_ref = None
        k = pl.program_id(2)
        part = jnp.dot(x_ref[...].astype(jnp.bfloat16), w_ref[...],
                       preferred_element_type=jnp.float32)

        @pl.when(k == 0)
        def _():
            acc_ref[...] = part

        @pl.when(k != 0)
        def _():
            acc_ref[...] += part

        @pl.when(k == pl.num_programs(2) - 1)
        def _():
            y = acc_ref[...] + b_ref[...]
            if has_res:
                y = y + r_ref[...].astype(jnp.float32)
            if relu:
                y = jnp.maximum(y, 0.0)
            o_ref[...] = y.astype(o_ref.dtype)
    return kernel


@functools.partial(jax.jit,
                   static_argnames=("n_out", "relu", "has_res", "out_dtype"))
def fused_matmul(x, w, bias, res, *, n_out, relu, has_res, out_dtype):
    """y = [relu]((x @ w) + bias [+ res]); w already BN-folded (bf16)."""
    M, K = x.shape
    Kp, Np = w.shape                      # padded only when K>1024 / N>512

    TM = min(256, round_up(M, 16))        # cap keeps the parallel M grid >= 2
    Mp = round_up(M, TM)                  # for M >= 512 (both v7x cores busy)
    TK = Kp if Kp <= 1024 else 512
    TN = Np if Np <= 512 else 256
    nk = Kp // TK

    if (Mp, Kp) != (M, K):
        x = jnp.pad(x, ((0, Mp - M), (0, Kp - K)))

    args = [x, w, bias]
    in_specs = [
        pl.BlockSpec((TM, TK), lambda i, j, k: (i, k)),
        pl.BlockSpec((TK, TN), lambda i, j, k: (k, j)),
        pl.BlockSpec((1, TN), lambda i, j, k: (0, j)),
    ]
    if has_res:
        if res.shape != (Mp, Np):
            res = jnp.pad(res, ((0, Mp - M), (0, Np - n_out)))
        args.append(res)
        in_specs.append(pl.BlockSpec((TM, TN), lambda i, j, k: (i, j)))

    out_isize = np.dtype(out_dtype).itemsize
    bytes_acc = (Mp * Kp * x.dtype.itemsize + Kp * Np * 2 + Np * 4
                 + (Mp * Np * res.dtype.itemsize if has_res else 0)
                 + Mp * Np * out_isize)

    if nk == 1:
        kernel = _mm_kernel_single_k(has_res, relu)
        scratch = []
    else:
        kernel = _mm_kernel_multi_k(has_res, relu)
        scratch = [pltpu.VMEM((TM, TN), jnp.float32)]

    out = pl.pallas_call(
        kernel,
        out_shape=jax.ShapeDtypeStruct((Mp, Np), out_dtype),
        grid=(Mp // TM, Np // TN, nk),
        in_specs=in_specs,
        out_specs=pl.BlockSpec((TM, TN), lambda i, j, k: (i, j)),
        scratch_shapes=scratch,
        compiler_params=pltpu.CompilerParams(
            dimension_semantics=("parallel", "parallel", "arbitrary"),
            vmem_limit_bytes=VMEM_LIMIT,
        ),
        cost_estimate=pl.CostEstimate(
            flops=2 * Mp * Kp * Np, transcendentals=0,
            bytes_accessed=bytes_acc),
    )(*args)
    if (Mp, Np) != (M, n_out):
        out = out[:M, :n_out]
    return out


# ---------------------------------------------------------------------------
# Kernel 2: 3x3 conv (stride 1, pad 1) + BN [+ residual] [+ ReLU]
#   One grid step per image.  The padded NHWC block stays in VMEM; the 9 taps
#   are an unrolled in-kernel MXU reduction (3 column windows x 3 aligned row
#   shifts) -- no im2col patches are materialized in HBM.
# ---------------------------------------------------------------------------
def _conv3x3_kernel(H, W, C, n_out, relu, has_res):
    Hp = H + 2

    def kernel(*refs):
        if has_res:
            x_ref, w_ref, b_ref, r_ref, o_ref = refs
        else:
            x_ref, w_ref, b_ref, o_ref = refs
            r_ref = None
        acc = None
        for dj in range(3):                                   # column tap (kw)
            col = x_ref[:, dj:dj + W, :].astype(jnp.bfloat16)  # (Hp, W, C)
            col = col.reshape(Hp * W, C)
            for di in range(3):                               # row tap (kh)
                xt = col[di * W:di * W + H * W, :]            # (H*W, C)
                p = jnp.dot(xt, w_ref[3 * di + dj],
                            preferred_element_type=jnp.float32)
                acc = p if acc is None else acc + p
        y = acc + b_ref[...]
        if has_res:
            y = y + r_ref[...].astype(jnp.float32)
        if relu:
            y = jnp.maximum(y, 0.0)
        o_ref[...] = y.astype(o_ref.dtype)

    return kernel


@functools.partial(jax.jit,
                   static_argnames=("n_out", "relu", "has_res", "out_dtype"))
def conv3x3_call(xp, w9, bias, res, *, n_out, relu, has_res, out_dtype):
    N, Hp, Wp, C = xp.shape
    H, W = Hp - 2, Wp - 2
    M = H * W

    args = [xp, w9, bias]
    in_specs = [
        pl.BlockSpec((None, Hp, Wp, C), lambda n: (n, 0, 0, 0)),
        pl.BlockSpec((9, C, n_out), lambda n: (0, 0, 0)),
        pl.BlockSpec((1, n_out), lambda n: (0, 0)),
    ]
    if has_res:
        args.append(res)
        in_specs.append(pl.BlockSpec((None, M, n_out), lambda n: (n, 0, 0)))

    out_isize = np.dtype(out_dtype).itemsize
    bytes_acc = (xp.size * xp.dtype.itemsize + w9.size * 2 + bias.size * 4
                 + (res.size * res.dtype.itemsize if has_res else 0)
                 + N * M * n_out * out_isize)

    return pl.pallas_call(
        _conv3x3_kernel(H, W, C, n_out, relu, has_res),
        out_shape=jax.ShapeDtypeStruct((N, M, n_out), out_dtype),
        grid=(N,),
        in_specs=in_specs,
        out_specs=pl.BlockSpec((None, M, n_out), lambda n: (n, 0, 0)),
        compiler_params=pltpu.CompilerParams(
            dimension_semantics=("parallel",),
            vmem_limit_bytes=VMEM_LIMIT,
        ),
        cost_estimate=pl.CostEstimate(
            flops=2 * N * M * 9 * C * n_out, transcendentals=0,
            bytes_accessed=bytes_acc),
    )(*args)


# ---------------------------------------------------------------------------
# Layer wrappers (only free reshapes + one small spatial zero-pad in XLA)
# ---------------------------------------------------------------------------
def conv1x1_bn(x, packed, *, relu, out_dtype):
    N, H, W, C = x.shape
    y = fused_matmul(x.reshape(N * H * W, C), packed["w"], packed["b"], None,
                     n_out=packed["n_out"], relu=relu, has_res=False,
                     out_dtype=out_dtype)
    return y.reshape(N, H, W, packed["n_out"])


def conv3x3_bn(x, packed, *, relu, residual=None, out_dtype):
    N, H, W, _ = x.shape
    xp = jnp.pad(x, ((0, 0), (1, 1), (1, 1), (0, 0)))
    res = None
    if residual is not None:
        res = residual.reshape(N, H * W, packed["n_out"])
    y = conv3x3_call(xp, packed["w"], packed["b"], res,
                     n_out=packed["n_out"], relu=relu,
                     has_res=residual is not None, out_dtype=out_dtype)
    return y.reshape(N, H, W, packed["n_out"])


def convT2x2_pre(x_flat, packed, *, res=None, relu, out_dtype):
    """ConvTranspose2d(k=2, s=2, bias=False)+BN as a matmul on the PRE-pixel-
    shuffle layout: (M, cin) -> (M, 4*cout), columns ordered (kh, kw, cout)."""
    return fused_matmul(x_flat, packed["w"], packed["b"], res,
                        n_out=packed["n_out"], relu=relu,
                        has_res=res is not None, out_dtype=out_dtype)


def pixel_shuffle_2x(y_pre, N, H, W, cout):
    y = y_pre.reshape(N, H, W, 2, 2, cout).transpose(0, 1, 3, 2, 4, 5)
    return y.reshape(N, 2 * H, 2 * W, cout)


# ---------------------------------------------------------------------------
# Parameter construction (deterministic; BN folded into weights/bias)
# ---------------------------------------------------------------------------
class KeyGen:
    def __init__(self, key):
        self.key = key

    def __call__(self):
        self.key, sub = jax.random.split(self.key)
        return sub


def xavier_conv(key, kh, kw, cin, cout):
    # torch Conv2d weight (cout,cin,kh,kw): fan_in=cin*k*k, fan_out=cout*k*k.
    fan_in, fan_out = cin * kh * kw, cout * kh * kw
    bound = float(np.sqrt(6.0 / (fan_in + fan_out)))
    return jax.random.uniform(key, (kh, kw, cin, cout), jnp.float32, -bound, bound)


def xavier_convT(key, cin, cout):
    # torch ConvTranspose2d weight (cin,cout,kh,kw): fan_in=cout*k*k,
    # fan_out=cin*k*k.  Stored here as (cin, 2, 2, cout).
    fan_in, fan_out = cout * 4, cin * 4
    bound = float(np.sqrt(6.0 / (fan_in + fan_out)))
    return jax.random.uniform(key, (cin, 2, 2, cout), jnp.float32, -bound, bound)


def bn_fold(c):
    """Inference-mode BatchNorm with the module's __init__ statistics."""
    gamma = jnp.ones((c,), jnp.float32)
    beta = jnp.zeros((c,), jnp.float32)
    mean = jnp.zeros((c,), jnp.float32)
    var = jnp.ones((c,), jnp.float32)
    scale = gamma / jnp.sqrt(var + EPS)
    bias = beta - mean * scale
    return scale, bias


def pack_matmul(w2d, bias_vec):
    """bf16 weight (BN scale folded) for the generic matmul kernel; pads only
    when K > 1024 / N > 512 (never at these channel counts)."""
    K, N = w2d.shape
    Kp = K if K <= 1024 else round_up(K, 512)
    Np = N if N <= 512 else round_up(N, 256)
    w = w2d.astype(jnp.bfloat16)
    b = bias_vec.astype(jnp.float32)
    if (Kp, Np) != (K, N):
        w = jnp.pad(w, ((0, Kp - K), (0, Np - N)))
        b = jnp.pad(b, (0, Np - N))
    return {"w": w, "b": b.reshape(1, Np), "n_out": int(N)}


def pack_conv3x3(w_hwio, scale, bias):
    """(3,3,cin,cout) HWIO weight, BN scale folded, stacked as 9 (cin,cout)
    slabs for the in-kernel tap reduction."""
    _, _, cin, cout = w_hwio.shape
    w = (w_hwio * scale[None, None, None, :]).reshape(9, cin, cout)
    return {"w": w.astype(jnp.bfloat16),
            "b": bias.astype(jnp.float32).reshape(1, cout),
            "n_out": int(cout)}


def make_trans_bottleneck_params(key, inplanes, planes, stride=1, upsample=False):
    """Parameters for one TransBottleneck.  `upsample=True` builds RTFNet's
    decoder upsample branch ConvTranspose2d(inplanes, planes, 2, 2)+BatchNorm
    (only supported with stride == 2)."""
    kg = KeyGen(key)
    p = {"stride": int(stride), "has_upsample": bool(upsample),
         "planes": int(planes), "raw": {}}

    # conv1 (1x1) + bn1
    w1 = xavier_conv(kg(), 1, 1, inplanes, planes).reshape(inplanes, planes)
    s, b = bn_fold(planes)
    p["conv1"] = pack_matmul(w1 * s[None, :], b)
    p["raw"]["w1"] = w1

    # conv2 (3x3, s=1, p=1) + bn2
    w2 = xavier_conv(kg(), 3, 3, planes, planes)
    s, b = bn_fold(planes)
    p["conv2"] = pack_conv3x3(w2, s, b)
    p["raw"]["w2"] = w2

    # conv3 + bn3
    s, b = bn_fold(planes)
    if upsample and stride != 1:
        assert stride == 2, "only stride=2 ConvTranspose2d(k=2) is supported"
        w3 = xavier_convT(kg(), planes, planes)                  # (cin,2,2,cout)
        p["conv3"] = pack_matmul(
            (w3 * s[None, None, None, :]).reshape(planes, 4 * planes),
            jnp.tile(b, 4))
        p["raw"]["w3"] = w3
        # upsample branch: ConvTranspose2d(inplanes, planes, 2, 2) + BN
        wu = xavier_convT(kg(), inplanes, planes)
        su, bu = bn_fold(planes)
        p["upsample"] = pack_matmul(
            (wu * su[None, None, None, :]).reshape(inplanes, 4 * planes),
            jnp.tile(bu, 4))
        p["raw"]["wu"] = wu
    else:
        w3 = xavier_conv(kg(), 3, 3, planes, planes)
        p["conv3"] = pack_conv3x3(w3, s, b)
        p["raw"]["w3"] = w3
        # TODO(synk): an `upsample` module with stride == 1 (1x1 conv + BN
        #             residual) is not implemented; identity residual is used,
        #             which requires inplanes == planes.
    return p


# ---------------------------------------------------------------------------
# Forward pass (matches TransBottleneck.forward, inference-mode BN)
# ---------------------------------------------------------------------------
def trans_bottleneck_forward(params, x_nchw):
    x = jnp.transpose(x_nchw, (0, 2, 3, 1)).astype(jnp.float32)   # NCHW -> NHWC
    N, H, W, cin = x.shape
    planes = params["planes"]

    # conv1 (1x1) + bn1 + relu             -> bf16 intermediate
    out = conv1x1_bn(x, params["conv1"], relu=True, out_dtype=jnp.bfloat16)
    # conv2 (3x3, s=1, p=1) + bn2 + relu   -> bf16 intermediate, in-VMEM taps
    out = conv3x3_bn(out, params["conv2"], relu=True, out_dtype=jnp.bfloat16)

    if params["has_upsample"] and params["stride"] != 1:
        # residual = bn(ConvTranspose2d(x)), kept pre-pixel-shuffle and fused
        # as the residual of conv3's matmul (add commutes with the shuffle).
        res_pre = convT2x2_pre(x.reshape(N * H * W, cin), params["upsample"],
                               relu=False, out_dtype=jnp.bfloat16)
        y_pre = convT2x2_pre(out.reshape(N * H * W, planes), params["conv3"],
                             res=res_pre, relu=True, out_dtype=jnp.float32)
        y = pixel_shuffle_2x(y_pre, N, H, W, planes)              # one shuffle
    else:
        assert params["stride"] == 1 and cin == planes, (
            "identity-residual path requires stride == 1 and inplanes == planes")
        # conv3 (3x3) + bn3 + identity residual + relu in one kernel
        y = conv3x3_bn(out, params["conv3"], relu=True, residual=x,
                       out_dtype=jnp.float32)

    return jnp.transpose(y, (0, 3, 1, 2))                          # NHWC -> NCHW


# ---------------------------------------------------------------------------
# Pure-JAX f32 reference (tolerance check of the bf16 Pallas path)
# ---------------------------------------------------------------------------
def _conv3x3_ref(x, w_hwio):
    return lax.conv_general_dilated(
        x, w_hwio, window_strides=(1, 1), padding=((1, 1), (1, 1)),
        dimension_numbers=("NHWC", "HWIO", "NHWC"),
        precision=lax.Precision.HIGHEST)


def _convT2x2_ref(x, w):   # w: (cin, 2, 2, cout)
    N, H, W, _ = x.shape
    y = jnp.einsum("nhwc,cabd->nhawbd", x, w, precision=lax.Precision.HIGHEST)
    return y.reshape(N, 2 * H, 2 * W, w.shape[-1])


def trans_bottleneck_reference(params, x_nchw):
    x = jnp.transpose(x_nchw, (0, 2, 3, 1)).astype(jnp.float32)
    raw = params["raw"]
    s = 1.0 / np.sqrt(1.0 + EPS)       # inference BN with __init__ statistics
    out = jax.nn.relu(jnp.einsum("nhwc,cd->nhwd", x, raw["w1"],
                                 precision=lax.Precision.HIGHEST) * s)
    out = jax.nn.relu(_conv3x3_ref(out, raw["w2"]) * s)
    if params["has_upsample"] and params["stride"] != 1:
        out = _convT2x2_ref(out, raw["w3"]) * s
        res = _convT2x2_ref(x, raw["wu"]) * s
    else:
        out = _conv3x3_ref(out, raw["w3"]) * s
        res = x
    y = jax.nn.relu(out + res)
    return jnp.transpose(y, (0, 3, 1, 2))


# ---------------------------------------------------------------------------
if __name__ == "__main__":
    key = jax.random.PRNGKey(0)
    k_blk1, k_blk2, k_x = jax.random.split(key, 3)

    batch, inplanes, planes, spatial = 2, 32, 16, 16

    # Block 1: stride=1, upsample=None -> identity residual, conv3 is 3x3.
    blk1 = make_trans_bottleneck_params(k_blk1, inplanes, inplanes,
                                        stride=1, upsample=False)
    # Block 2: stride=2 with upsample (ConvTranspose2d + BN), as in RTFNet.
    blk2 = make_trans_bottleneck_params(k_blk2, inplanes, planes,
                                        stride=2, upsample=True)

    x = jax.random.normal(k_x, (batch, inplanes, spatial, spatial), jnp.float32)

    fwd1 = jax.jit(functools.partial(trans_bottleneck_forward, blk1))
    fwd2 = jax.jit(functools.partial(trans_bottleneck_forward, blk2))

    y1 = fwd1(x)
    y2 = fwd2(y1)
    y2 = jax.block_until_ready(y2)

    assert y1.shape == (batch, inplanes, spatial, spatial), y1.shape
    assert y2.shape == (batch, planes, 2 * spatial, 2 * spatial), y2.shape
    assert bool(jnp.all(jnp.isfinite(y1))) and bool(jnp.all(jnp.isfinite(y2)))

    # Tolerance check vs. pure-JAX f32 reference (bf16 MXU inputs -> ~1e-2).
    y1_ref = trans_bottleneck_reference(blk1, x)
    y2_ref = trans_bottleneck_reference(blk2, y1_ref)

    def max_rel_err(a, b):
        return float(jnp.max(jnp.abs(a - b)) / (jnp.max(jnp.abs(b)) + 1e-6))

    err1, err2 = max_rel_err(y1, y1_ref), max_rel_err(y2, y2_ref)
    assert err1 < 0.05 and err2 < 0.05, (err1, err2)

    print("KERNEL_OK")
</pallas_src>

<mosaic_0001>
module attributes {stable_mosaic.version = 11 : i64} {
  func.func @kernel(%arg0: i32, %arg1: i32, %arg2: i32, %arg3: memref<256x32xf32, #tpu.memory_space<vmem>>, %arg4: memref<32x32xbf16, #tpu.memory_space<vmem>>, %arg5: memref<1x32xf32, #tpu.memory_space<vmem>>, %arg6: memref<256x32xbf16, #tpu.memory_space<vmem>>) attributes {dimension_semantics = [#tpu.dimension_semantics<parallel>, #tpu.dimension_semantics<parallel>, #tpu.dimension_semantics<arbitrary>], iteration_bounds = array<i64: 2, 1, 1>, scalar_prefetch = 0 : i64, scratch_operands = 0 : i64, tpu.core_type = #tpu.core_type<tc>, window_params = [{transform_indices = @transform_0, window_bounds = array<i64: 256, 32>}, {transform_indices = @transform_1, window_bounds = array<i64: 32, 32>}, {transform_indices = @transform_2, window_bounds = array<i64: 1, 32>}, {transform_indices = @transform_3, window_bounds = array<i64: 256, 32>}]} {
    %c0 = arith.constant 0 : index
    %c0_0 = arith.constant 0 : index
    %0 = vector.load %arg3[%c0, %c0_0] : memref<256x32xf32, #tpu.memory_space<vmem>>, vector<256x32xf32>
    %1 = arith.truncf %0 : vector<256x32xf32> to vector<256x32xbf16>
    %c0_1 = arith.constant 0 : index
    %c0_2 = arith.constant 0 : index
    %2 = vector.load %arg4[%c0_1, %c0_2] : memref<32x32xbf16, #tpu.memory_space<vmem>>, vector<32x32xbf16>
    %cst = arith.constant dense<0.000000e+00> : vector<256x32xf32>
    %3 = tpu.matmul %1, %2, %cst {dimension_numbers = #tpu.dot_dimension_numbers<[1], [0], [0], [1], [0, 0, 1, 1], [], []>} : vector<256x32xbf16>, vector<32x32xbf16>, vector<256x32xf32> -> vector<256x32xf32>
    %c0_3 = arith.constant 0 : index
    %c0_4 = arith.constant 0 : index
    %4 = vector.load %arg5[%c0_3, %c0_4] : memref<1x32xf32, #tpu.memory_space<vmem>>, vector<1x32xf32>
    %5 = vector.broadcast %4 : vector<1x32xf32> to vector<256x32xf32>
    %6 = arith.addf %3, %5 : vector<256x32xf32>
    %cst_5 = arith.constant 0.000000e+00 : f32
    %7 = vector.broadcast %cst_5 : f32 to vector<256x32xf32>
    %8 = arith.maximumf %6, %7 : vector<256x32xf32>
    %9 = arith.truncf %8 : vector<256x32xf32> to vector<256x32xbf16>
    %c0_6 = arith.constant 0 : index
    %c0_7 = arith.constant 0 : index
    %10 = vector.load %arg6[%c0_6, %c0_7] : memref<256x32xbf16, #tpu.memory_space<vmem>>, vector<256x32xbf16>
    tpu.vector_store %arg6[%c0_6, %c0_7], %9 {strides = array<i32>} : memref<256x32xbf16, #tpu.memory_space<vmem>>, vector<256x32xbf16>,
    return
  }
  func.func @transform_0(%arg0: i32, %arg1: i32, %arg2: i32) -> (i32, i32) {
    %c0_i32 = arith.constant 0 : i32
    return %arg0, %arg2 : i32, i32
  }
  func.func @transform_1(%arg0: i32, %arg1: i32, %arg2: i32) -> (i32, i32) {
    %c0_i32 = arith.constant 0 : i32
    return %arg2, %arg1 : i32, i32
  }
  func.func @transform_2(%arg0: i32, %arg1: i32, %arg2: i32) -> (i32, i32) {
    %c0_i32 = arith.constant 0 : i32
    %c0_i32_0 = arith.constant 0 : i32
    return %c0_i32, %arg1 : i32, i32
  }
  func.func @transform_3(%arg0: i32, %arg1: i32, %arg2: i32) -> (i32, i32) {
    %c0_i32 = arith.constant 0 : i32
    return %arg0, %arg1 : i32, i32
  }
}

</mosaic_0001>

<llo_original>
// kernel: fused_matmul.1
$region0: #{fused_matmul.1}
  #allocation0 [shape = 'u32[]', space=smem, size = 0x4, offset = 0x4, fixed_abs, tag = 'smem constant byte address 0x4 - core index']
  #allocation1 [shape = 'u32[144,128]{1,0:T(1,128)}', space=vmem, size = 0x12000, scoped, tag = 'internal scratch']
  %s0 = inlined_call_operand.vmem [shape: f32[512,32], index: 0, kind: input, shape index: {}]
  %s1 = inlined_call_operand.vmem [shape: bf16[32,32], index: 1, kind: input, shape index: {}]
  %s2 = inlined_call_operand.vmem [shape: f32[1,32], index: 2, kind: input, shape index: {}]
  %s3 = inlined_call_operand.vmem [shape: bf16[512,32], index: 3, kind: output, shape index: {}]
  %s4 = sld [smem:[#allocation0]]
  $region45: #{fused_matmul.1} parent=0
    _
  %s6 = ssub.s32 1, %s4
  %s7 = scalar_select 0, %s6, %s4
  loop: start=0, step=1, limit=4
  $region2: #{fused_matmul.1} parent=0 // loop_pre_header
    _
  $region3: #{fused_matmul.1} parent=0 // loop_header
    %s9 = sphi 0, %s13
    %p10 = scmp.ge.s32.totalorder %s9, 4
    %s16 = sphi 0, %s35
    %s17 = sphi 0, %s31
    %s18 = sphi 0, %s27
    %s19 = sphi 0, %s16
    %s20 = sphi 0, %s17
    %s21 = sphi 0, %s18
    %s22 = sphi 0, %s19
    %s23 = sphi 0, %s20
    %s24 = sphi 0, %s21
    %s40 = sphi 0, %s42
    %s43 = sphi 0, %s40
    %s44 = sphi 0, %s43
    %s60 = sphi 0, %s44
    %s68 = sphi 0, %s70
    %s71 = sphi 0, %s68
    %s72 = sphi 0, %s71
    %s88 = sphi 0, %s72
    %s94 = sphi 0, %s96
    %s97 = sphi 0, %s94
    %s98 = sphi 0, %s97
    %s114 = sphi 0, %s98
    %s122 = sphi 0, %s124
    %s125 = sphi 0, %s122
    %s126 = sphi 0, %s125
    %s142 = sphi 0, %s126
  $region4: #{fused_matmul.1} parent=0 // loop_header_branch
    %12 = sbr.rel (%p10) target = $region8
  $region5: #{fused_matmul.1} parent=0 // loop_body
    %s14 = ssub.s32 %s9, 1
    %s15 = ssub.s32 %s9, 2
    %s25 = sadd.s32 1, %s18
    %p26 = scmp.ge.s32.totalorder %s25, 1
    %s27 = scalar_select %p26, 0, %s25
    %s28 = sadd.s32 1, %s17
    %s29 = scalar_select %p26, %s28, %s17
    %p30 = scmp.ge.s32.totalorder %s29, 1
    %s31 = scalar_select %p30, 0, %s29
    %s32 = sadd.s32 1, %s16
    %s33 = scalar_select %p30, %s32, %s16
    %p34 = scmp.ge.s32.totalorder %s33, 2
    %s35 = scalar_select %p34, 0, %s33
    %s36 = ssub.s32 %s16, %s35
    %s37 = ssub.s32 %s18, %s27
    %s38 = sor.u32 %s36, %s37
    %p39 = scmp.eq.s32.totalorder %s38, 0
    %s41 = sadd.s32 %s40, 1
    %s42 = scalar_select %p39, %s40, %s41
    %p45 = pneg %p39
    %p46 = scmp.eq.s32.totalorder %s9, 1
    %p47 = por %p45, %p46
    %p48 = scmp.ne.s32.totalorder %s40, %s43
    %p49 = scmp.eq.s32.totalorder %s9, 0
    %p50 = por %p48, %p49
    %p51 = scmp.ne.s32.totalorder %s40, %s43
    %p52 = scmp.eq.s32.totalorder %s14, 1
    %p53 = por %p51, %p52
    %p54 = scmp.ne.s32.totalorder %s43, %s44
    %p55 = scmp.eq.s32.totalorder %s14, 0
    %p56 = por %p54, %p55
    %p57 = scmp.ne.s32.totalorder %s43, %s44
    %p58 = scmp.eq.s32.totalorder %s15, 1
    %p59 = por %p57, %p58
    %p61 = scmp.ne.s32.totalorder %s44, %s60
    %p62 = scmp.eq.s32.totalorder %s15, 0
    %p63 = por %p61, %p62
    %s64 = ssub.s32 %s18, %s27
    %s65 = ssub.s32 %s17, %s31
    %s66 = sor.u32 %s64, %s65
    %p67 = scmp.eq.s32.totalorder %s66, 0
    %s69 = sadd.s32 %s68, 1
    %s70 = scalar_select %p67, %s68, %s69
    %p73 = pneg %p67
    %p74 = scmp.eq.s32.totalorder %s9, 1
    %p75 = por %p73, %p74
    %p76 = scmp.ne.s32.totalorder %s68, %s71
    %p77 = scmp.eq.s32.totalorder %s9, 0
    %p78 = por %p76, %p77
    %p79 = scmp.ne.s32.totalorder %s68, %s71
    %p80 = scmp.eq.s32.totalorder %s14, 1
    %p81 = por %p79, %p80
    %p82 = scmp.ne.s32.totalorder %s71, %s72
    %p83 = scmp.eq.s32.totalorder %s14, 0
    %p84 = por %p82, %p83
    %p85 = scmp.ne.s32.totalorder %s71, %s72
    %p86 = scmp.eq.s32.totalorder %s15, 1
    %p87 = por %p85, %p86
    %p89 = scmp.ne.s32.totalorder %s72, %s88
    %p90 = scmp.eq.s32.totalorder %s15, 0
    %p91 = por %p89, %p90
    %s92 = ssub.s32 %s17, %s31
    %p93 = scmp.eq.s32.totalorder %s92, 0
    %s95 = sadd.s32 %s94, 1
    %s96 = scalar_select %p93, %s94, %s95
    %p99 = pneg %p93
    %p100 = scmp.eq.s32.totalorder %s9, 1
    %p101 = por %p99, %p100
    %p102 = scmp.ne.s32.totalorder %s94, %s97
    %p103 = scmp.eq.s32.totalorder %s9, 0
    %p104 = por %p102, %p103
    %p105 = scmp.ne.s32.totalorder %s94, %s97
    %p106 = scmp.eq.s32.totalorder %s14, 1
    %p107 = por %p105, %p106
    %p108 = scmp.ne.s32.totalorder %s97, %s98
    %p109 = scmp.eq.s32.totalorder %s14, 0
    %p110 = por %p108, %p109
    %p111 = scmp.ne.s32.totalorder %s97, %s98
    %p112 = scmp.eq.s32.totalorder %s15, 1
    %p113 = por %p111, %p112
    %p115 = scmp.ne.s32.totalorder %s98, %s114
    %p116 = scmp.eq.s32.totalorder %s15, 0
    %p117 = por %p115, %p116
    %s118 = ssub.s32 %s16, %s35
    %s119 = ssub.s32 %s17, %s31
    %s120 = sor.u32 %s118, %s119
    %p121 = scmp.eq.s32.totalorder %s120, 0
    %s123 = sadd.s32 %s122, 1
    %s124 = scalar_select %p121, %s122, %s123
    %p127 = pneg %p121
    %p128 = scmp.eq.s32.totalorder %s9, 1
    %p129 = por %p127, %p128
    %p130 = scmp.ne.s32.totalorder %s122, %s125
    %p131 = scmp.eq.s32.totalorder %s9, 0
    %p132 = por %p130, %p131
    %p133 = scmp.ne.s32.totalorder %s122, %s125
    %p134 = scmp.eq.s32.totalorder %s14, 1
    %p135 = por %p133, %p134
    %p136 = scmp.ne.s32.totalorder %s125, %s126
    %p137 = scmp.eq.s32.totalorder %s14, 0
    %p138 = por %p136, %p137
    %p139 = scmp.ne.s32.totalorder %s125, %s126
    %p140 = scmp.eq.s32.totalorder %s15, 1
    %p141 = por %p139, %p140
    %p143 = scmp.ne.s32.totalorder %s126, %s142
    %p144 = scmp.eq.s32.totalorder %s15, 0
    %p145 = por %p143, %p144
    %p146 = scmp.le.s32.totalorder 1, %s9
    %p147 = scmp.lt.s32.totalorder %s9, 3
    %p148 = pnand %p146, %p147
    %p149 = pneg %p148
    // Predicated region
    $region9: #{fused_matmul.1} parent=5 // pred_check
      _
    $region10: #{fused_matmul.1} parent=5 // pred_check_branch
      %151 = sbr.rel (%p148) target = $region12
    $region11: #{fused_matmul.1} parent=5 // pred_region
      %s152 = ssub.s32 %s9, 1
      // Predicated region
      $region13: #{fused_matmul.1} parent=11 // pred_check
        %p153 = pneg %p84
      $region14: #{fused_matmul.1} parent=11 // pred_check_branch
        %155 = sbr.rel (%p153) target = $region16
      $region15: #{fused_matmul.1} parent=11 // pred_region
        %s156 = smul.u32 4, %s21
        %p157 = scmp.lt.s32.totalorder %s156, 3
        %s158 = scalar_select %p157, %s156, 3
        %p159 = scmp.lt.s32.totalorder %s20, 0
        %s160 = scalar_select %p159, %s20, 0
        %s161 = sadd.s32 %s160, %s158
        %s162 = smul.addr %s161, 4
        %s163 = scalar_lea.vmem %s1, %s162
        %s164 = smul.u32 4, %s21
      $region16: #{fused_matmul.1} parent=11 // pred_fallthru
        _
      // Predicated region
      $region17: #{fused_matmul.1} parent=11 // pred_check
        %p165 = pneg %p110
      $region18: #{fused_matmul.1} parent=11 // pred_check_branch
        %167 = sbr.rel (%p165) target = $region20
      $region19: #{fused_matmul.1} parent=11 // pred_region
        %p168 = scmp.lt.s32.totalorder %s20, 0
        %s169 = scalar_select %p168, %s20, 0
        %s170 = scalar_lea.vmem %s2, %s169
      $region20: #{fused_matmul.1} parent=11 // pred_fallthru
        _
    $region12: #{fused_matmul.1} parent=5 // pred_fallthru
      _
    %p171 = scmp.lt.s32.totalorder %s9, 2
    // Predicated region
    $region21: #{fused_matmul.1} parent=5 // pred_check
      %p172 = pneg %p171
    $region22: #{fused_matmul.1} parent=5 // pred_check_branch
      %174 = sbr.rel (%p172) target = $region24
    $region23: #{fused_matmul.1} parent=5 // pred_region
      // Predicated region
      $region25: #{fused_matmul.1} parent=23 // pred_check
        %p175 = pneg %p50
      $region26: #{fused_matmul.1} parent=23 // pred_check_branch
        %177 = sbr.rel (%p175) target = $region28
      $region27: #{fused_matmul.1} parent=23 // pred_region
        %s178 = smul.u32 32, %s16
        %p179 = scmp.lt.s32.totalorder %s178, 63
        %s180 = scalar_select %p179, %s178, 63
        %p181 = scmp.lt.s32.totalorder %s18, 0
        %s182 = scalar_select %p181, %s18, 0
        %s183 = sadd.s32 %s182, %s180
        %s184 = smul.addr %s183, 8
        %s185 = scalar_lea.vmem %s0, %s184
        %s186 = smul.u32 32, %s16
      $region28: #{fused_matmul.1} parent=23 // pred_fallthru
        _
    $region24: #{fused_matmul.1} parent=5 // pred_fallthru
      _
    %p187 = scmp.le.s32.totalorder 1, %s9
    %p188 = scmp.lt.s32.totalorder %s9, 3
    %p189 = pnand %p187, %p188
    %p190 = pneg %p189
    // Predicated region
    $region29: #{fused_matmul.1} parent=5 // pred_check
      _
    $region30: #{fused_matmul.1} parent=5 // pred_check_branch
      %192 = sbr.rel (%p189) target = $region32
    $region31: #{fused_matmul.1} parent=5 // pred_region
      %s193 = ssub.s32 %s9, 1
      %s194 = smul.u32 32, %s19
      %p195 = scmp.lt.s32.totalorder %s194, 63
      %s196 = scalar_select %p195, %s194, 63
      %p197 = scmp.lt.s32.totalorder %s21, 0
      %s198 = scalar_select %p197, %s21, 0
      %s199 = sadd.s32 %s198, %s196
      %s200 = smul.addr %s199, 8
      %s201 = scalar_lea.vmem %s0, %s200
      %p202 = pneg %p56
      %p203 = pneg %p53
      %s204 = smul.u32 4, %s21
      %p205 = scmp.lt.s32.totalorder %s204, 3
      %s206 = scalar_select %p205, %s204, 3
      %p207 = scmp.lt.s32.totalorder %s20, 0
      %s208 = scalar_select %p207, %s20, 0
      %s209 = sadd.s32 %s208, %s206
      %s210 = smul.addr %s209, 4
      %s211 = scalar_lea.vmem %s1, %s210
      %p212 = pneg %p84
      %p213 = pneg %p81
      %p214 = scmp.lt.s32.totalorder %s20, 0
      %s215 = scalar_select %p214, %s20, 0
      %s216 = scalar_lea.vmem %s2, %s215
      %p217 = pneg %p110
      %p218 = pneg %p107
      %p219 = pneg %p138
      %p220 = pneg %p135
      %s221 = smul.u32 32, %s19
      %p222 = scmp.lt.s32.totalorder %s221, 63
      %s223 = scalar_select %p222, %s221, 63
      %p224 = scmp.lt.s32.totalorder %s20, 0
      %s225 = scalar_select %p224, %s20, 0
      %s226 = sadd.s32 %s225, %s223
      %s227 = smul.addr %s226, 4
      %s228 = scalar_lea.vmem %s3, %s227
      %s229 = smul.u32 32, %s19
      %p230 = scmp.lt.s32.totalorder %s229, 63
      %s231 = scalar_select %p230, %s229, 63
      %p232 = scmp.lt.s32.totalorder %s21, 0
      %s233 = scalar_select %p232, %s21, 0
      %s234 = sadd.s32 %s233, %s231
      %s235 = smul.addr %s234, 8
      %s236 = scalar_lea.vmem %s0, %s235
      %s237 = smul.u32 32, %s19
      %s238 = smul.u32 4, %s21
      %p239 = scmp.lt.s32.totalorder %s238, 3
      %s240 = scalar_select %p239, %s238, 3
      %p241 = scmp.lt.s32.totalorder %s20, 0
      %s242 = scalar_select %p241, %s20, 0
      %s243 = sadd.s32 %s242, %s240
      %s244 = smul.addr %s243, 4
      %s245 = scalar_lea.vmem %s1, %s244
      %s246 = smul.u32 4, %s21
      %p247 = scmp.lt.s32.totalorder %s20, 0
      %s248 = scalar_select %p247, %s20, 0
      %s249 = scalar_lea.vmem %s2, %s248
      %s250 = smul.u32 32, %s19
      %p251 = scmp.lt.s32.totalorder %s250, 63
      %s252 = scalar_select %p251, %s250, 63
      %p253 = scmp.lt.s32.totalorder %s20, 0
      %s254 = scalar_select %p253, %s20, 0
      %s255 = sadd.s32 %s254, %s252
      %s256 = smul.addr %s255, 4
      %s257 = scalar_lea.vmem %s3, %s256
      %s258 = smul.u32 32, %s19
      %v260 = vld [vmem:[%s236] sm:$0xff]
      %v261 = vld [vmem:[%s236 + $0x8] sm:$0xff]
      %v262 = vld [vmem:[%s236 + $0x10] sm:$0xff]
      %v263 = vld [vmem:[%s236 + $0x18] sm:$0xff]
      %v264 = vld [vmem:[%s236 + $0x20] sm:$0xff]
      %v265 = vld [vmem:[%s236 + $0x28] sm:$0xff]
      %v266 = vld [vmem:[%s236 + $0x30] sm:$0xff]
      %v267 = vld [vmem:[%s236 + $0x38] sm:$0xff]
      %v268 = vld [vmem:[%s236 + $0x40] sm:$0xff]
      %v269 = vld [vmem:[%s236 + $0x48] sm:$0xff]
      %v270 = vld [vmem:[%s236 + $0x50] sm:$0xff]
      %v271 = vld [vmem:[%s236 + $0x58] sm:$0xff]
      %v272 = vld [vmem:[%s236 + $0x60] sm:$0xff]
      %v273 = vld [vmem:[%s236 + $0x68] sm:$0xff]
      %v274 = vld [vmem:[%s236 + $0x70] sm:$0xff]
      %v275 = vld [vmem:[%s236 + $0x78] sm:$0xff]
      %v276 = vld [vmem:[%s236 + $0x80] sm:$0xff]
      %v277 = vld [vmem:[%s236 + $0x88] sm:$0xff]
      %v278 = vld [vmem:[%s236 + $0x90] sm:$0xff]
      %v279 = vld [vmem:[%s236 + $0x98] sm:$0xff]
      %v280 = vld [vmem:[%s236 + $0xa0] sm:$0xff]
      %v281 = vld [vmem:[%s236 + $0xa8] sm:$0xff]
      %v282 = vld [vmem:[%s236 + $0xb0] sm:$0xff]
      %v283 = vld [vmem:[%s236 + $0xb8] sm:$0xff]
      %v284 = vld [vmem:[%s236 + $0xc0] sm:$0xff]
      %v285 = vld [vmem:[%s236 + $0xc8] sm:$0xff]
      %v286 = vld [vmem:[%s236 + $0xd0] sm:$0xff]
      %v287 = vld [vmem:[%s236 + $0xd8] sm:$0xff]
      %v288 = vld [vmem:[%s236 + $0xe0] sm:$0xff]
      %v289 = vld [vmem:[%s236 + $0xe8] sm:$0xff]
      %v290 = vld [vmem:[%s236 + $0xf0] sm:$0xff]
      %v291 = vld [vmem:[%s236 + $0xf8] sm:$0xff]
      %v292 = vpack.c.bf16 %v261, %v260
      %v293 = vpack.c.bf16 %v263, %v262
      %v294 = vpack.c.bf16 %v265, %v264
      %v295 = vpack.c.bf16 %v267, %v266
      %v296 = vpack.c.bf16 %v269, %v268
      %v297 = vpack.c.bf16 %v271, %v270
      %v298 = vpack.c.bf16 %v273, %v272
      %v299 = vpack.c.bf16 %v275, %v274
      %v300 = vpack.c.bf16 %v277, %v276
      %v301 = vpack.c.bf16 %v279, %v278
      %v302 = vpack.c.bf16 %v281, %v280
      %v303 = vpack.c.bf16 %v283, %v282
      %v304 = vpack.c.bf16 %v285, %v284
      %v305 = vpack.c.bf16 %v287, %v286
      %v306 = vpack.c.bf16 %v289, %v288
      %v307 = vpack.c.bf16 %v291, %v290
      %v308 = vld [vmem:[%s245] sm:$0xf]
      %v309 = vld [vmem:[%s245 + $0x4] sm:$0xf]
      %v310 = vld [vmem:[%s245 + $0x8] sm:$0xf]
      %v311 = vld [vmem:[%s245 + $0xc] sm:$0xf]
      %v312 = vld [vmem:[%s249] sm:$0x1]
      %v314 = vlaneseq
      %v315 = vshrl.u32 %v314, 7
      %v316 = vsub.s32 0, %v315
      %v317 = vrot.slane %v312, %v316
      %v323 = vunpack.c.l.b16 %v308
      %v324 = vunpack.c.l.b16 %v309
      %v325 = vunpack.c.l.b16 %v310
      %v326 = vunpack.c.l.b16 %v311
      %v327 = vpack.c.b16 %v324, %v323
      %v328 = vpack.c.b16 %v326, %v325
      %vm331 = vcmask 261120
      %v333 = vsel %vm331, %v292, 0
      %v336 = vsel %vm331, %v293, 0
      %v339 = vsel %vm331, %v294, 0
      %v342 = vsel %vm331, %v295, 0
      %v345 = vsel %vm331, %v296, 0
      %v348 = vsel %vm331, %v297, 0
      %v351 = vsel %vm331, %v298, 0
      %v354 = vsel %vm331, %v299, 0
      %v357 = vsel %vm331, %v300, 0
      %v360 = vsel %vm331, %v301, 0
      %v363 = vsel %vm331, %v302, 0
      %v366 = vsel %vm331, %v303, 0
      %v369 = vsel %vm331, %v304, 0
      %v372 = vsel %vm331, %v305, 0
      %v375 = vsel %vm331, %v306, 0
      %v378 = vsel %vm331, %v307, 0
      %380 = vmatprep.subr.bf16.mxu0 0
      %381 = vmatpush1.bf16.msra.mxu0 %v327
      %382 = vmatprep.subr.bf16.mxu0 0
      %383 = vmatpush1.bf16.msra.mxu0 %v328
      %384 = vmatprep.subr.bf16.mxu0 0
      %385 = vmatpush1.bf16.msra.mxu0 0
      %386 = vmatprep.subr.bf16.mxu0 0
      %387 = vmatpush1.bf16.msra.mxu0 0
      %388 = vmatprep.subr.bf16.mxu0 0
      %389 = vmatpush1.bf16.msra.mxu0 0
      %390 = vmatprep.subr.bf16.mxu0 0
      %391 = vmatpush1.bf16.msra.mxu0 0
      %392 = vmatprep.subr.bf16.mxu0 0
      %393 = vmatpush1.bf16.msra.mxu0 0
      %394 = vmatprep.subr.bf16.mxu0 0
      %395 = vmatpush1.bf16.msra.mxu0 0
      %396 = vmatprep.subr.bf16.mxu0 0
      %397 = vmatpush1.bf16.msra.mxu0 0
      %398 = vmatprep.subr.bf16.mxu0 0
      %399 = vmatpush1.bf16.msra.mxu0 0
      %400 = vmatprep.subr.bf16.mxu0 0
      %401 = vmatpush1.bf16.msra.mxu0 0
      %402 = vmatprep.subr.bf16.mxu0 0
      %403 = vmatpush1.bf16.msra.mxu0 0
      %404 = vmatprep.subr.bf16.mxu0 0
      %405 = vmatpush1.bf16.msra.mxu0 0
      %406 = vmatprep.subr.bf16.mxu0 0
      %407 = vmatpush1.bf16.msra.mxu0 0
      %408 = vmatprep.subr.bf16.mxu0 0
      %409 = vmatpush1.bf16.msra.mxu0 0
      %410 = vmatprep.subr.bf16.mxu0 0
      %411 = vmatpush1.bf16.msra.mxu0 0
      %412 = vmatprep.mubr.bf16.mxu0 0
      %413 = vmatmul.mubr.bf16.gmra.mrb[0].mxu0 %v333
      %v414 = vpop.f32.mrb[0].mxu0
      %v415 = vadd.f32 %v317, %v414
      %v416 = vpop.f32.mrb[0].mxu0
      %v417 = vpop.f32.mrb[0].mxu0
      %v418 = vadd.f32 %v317, %v417
      %v419 = vpop.f32.mrb[0].mxu0
      %420 = vmatprep.mubr.bf16.mxu0 0
      %421 = vmatmul.mubr.bf16.gmra.mrb[0].mxu0 %v336
      %v422 = vpop.f32.mrb[0].mxu0
      %v423 = vadd.f32 %v317, %v422
      %v424 = vpop.f32.mrb[0].mxu0
      %v425 = vpop.f32.mrb[0].mxu0
      %v426 = vadd.f32 %v317, %v425
      %v427 = vpop.f32.mrb[0].mxu0
      %428 = vmatprep.mubr.bf16.mxu0 0
      %429 = vmatmul.mubr.bf16.gmra.mrb[0].mxu0 %v339
      %v430 = vpop.f32.mrb[0].mxu0
      %v431 = vadd.f32 %v317, %v430
      %v432 = vpop.f32.mrb[0].mxu0
      %v433 = vpop.f32.mrb[0].mxu0
      %v434 = vadd.f32 %v317, %v433
      %v435 = vpop.f32.mrb[0].mxu0
      %436 = vmatprep.mubr.bf16.mxu0 0
      %437 = vmatmul.mubr.bf16.gmra.mrb[0].mxu0 %v342
      %v438 = vpop.f32.mrb[0].mxu0
      %v439 = vadd.f32 %v317, %v438
      %v440 = vpop.f32.mrb[0].mxu0
      %v441 = vpop.f32.mrb[0].mxu0
      %v442 = vadd.f32 %v317, %v441
      %v443 = vpop.f32.mrb[0].mxu0
      %444 = vmatprep.mubr.bf16.mxu0 0
      %445 = vmatmul.mubr.bf16.gmra.mrb[0].mxu0 %v345
      %v446 = vpop.f32.mrb[0].mxu0
      %v447 = vadd.f32 %v317, %v446
      %v448 = vpop.f32.mrb[0].mxu0
      %v449 = vpop.f32.mrb[0].mxu0
      %v450 = vadd.f32 %v317, %v449
      %v451 = vpop.f32.mrb[0].mxu0
      %452 = vmatprep.mubr.bf16.mxu0 0
      %453 = vmatmul.mubr.bf16.gmra.mrb[0].mxu0 %v348
      %v454 = vpop.f32.mrb[0].mxu0
      %v455 = vadd.f32 %v317, %v454
      %v456 = vpop.f32.mrb[0].mxu0
      %v457 = vpop.f32.mrb[0].mxu0
      %v458 = vadd.f32 %v317, %v457
      %v459 = vpop.f32.mrb[0].mxu0
      %460 = vmatprep.mubr.bf16.mxu0 0
      %461 = vmatmul.mubr.bf16.gmra.mrb[0].mxu0 %v351
      %v462 = vpop.f32.mrb[0].mxu0
      %v463 = vadd.f32 %v317, %v462
      %v464 = vpop.f32.mrb[0].mxu0
      %v465 = vpop.f32.mrb[0].mxu0
      %v466 = vadd.f32 %v317, %v465
      %v467 = vpop.f32.mrb[0].mxu0
      %468 = vmatprep.mubr.bf16.mxu0 0
      %469 = vmatmul.mubr.bf16.gmra.mrb[0].mxu0 %v354
      %v470 = vpop.f32.mrb[0].mxu0
      %v471 = vadd.f32 %v317, %v470
      %v472 = vpop.f32.mrb[0].mxu0
      %v473 = vpop.f32.mrb[0].mxu0
      %v474 = vadd.f32 %v317, %v473
      %v475 = vpop.f32.mrb[0].mxu0
      %476 = vmatprep.mubr.bf16.mxu0 0
      %477 = vmatmul.mubr.bf16.gmra.mrb[0].mxu0 %v357
      %v478 = vpop.f32.mrb[0].mxu0
      %v479 = vadd.f32 %v317, %v478
      %v480 = vpop.f32.mrb[0].mxu0
      %v481 = vpop.f32.mrb[0].mxu0
      %v482 = vadd.f32 %v317, %v481
      %v483 = vpop.f32.mrb[0].mxu0
      %484 = vmatprep.mubr.bf16.mxu0 0
      %485 = vmatmul.mubr.bf16.gmra.mrb[0].mxu0 %v360
      %v486 = vpop.f32.mrb[0].mxu0
      %v487 = vadd.f32 %v317, %v486
      %v488 = vpop.f32.mrb[0].mxu0
      %v489 = vpop.f32.mrb[0].mxu0
      %v490 = vadd.f32 %v317, %v489
      %v491 = vpop.f32.mrb[0].mxu0
      %492 = vmatprep.mubr.bf16.mxu0 0
      %493 = vmatmul.mubr.bf16.gmra.mrb[0].mxu0 %v363
      %v494 = vpop.f32.mrb[0].mxu0
      %v495 = vadd.f32 %v317, %v494
      %v496 = vpop.f32.mrb[0].mxu0
      %v497 = vpop.f32.mrb[0].mxu0
      %v498 = vadd.f32 %v317, %v497
      %v499 = vpop.f32.mrb[0].mxu0
      %500 = vmatprep.mubr.bf16.mxu0 0
      %501 = vmatmul.mubr.bf16.gmra.mrb[0].mxu0 %v366
      %v502 = vpop.f32.mrb[0].mxu0
      %v503 = vadd.f32 %v317, %v502
      %v504 = vpop.f32.mrb[0].mxu0
      %v505 = vpop.f32.mrb[0].mxu0
      %v506 = vadd.f32 %v317, %v505
      %v507 = vpop.f32.mrb[0].mxu0
      %508 = vmatprep.mubr.bf16.mxu0 0
      %509 = vmatmul.mubr.bf16.gmra.mrb[0].mxu0 %v369
      %v510 = vpop.f32.mrb[0].mxu0
      %v511 = vadd.f32 %v317, %v510
      %v512 = vpop.f32.mrb[0].mxu0
      %v513 = vpop.f32.mrb[0].mxu0
      %v514 = vadd.f32 %v317, %v513
      %v515 = vpop.f32.mrb[0].mxu0
      %516 = vmatprep.mubr.bf16.mxu0 0
      %517 = vmatmul.mubr.bf16.gmra.mrb[0].mxu0 %v372
      %v518 = vpop.f32.mrb[0].mxu0
      %v519 = vadd.f32 %v317, %v518
      %v520 = vpop.f32.mrb[0].mxu0
      %v521 = vpop.f32.mrb[0].mxu0
      %v522 = vadd.f32 %v317, %v521
      %v523 = vpop.f32.mrb[0].mxu0
      %524 = vmatprep.mubr.bf16.mxu0 0
      %525 = vmatmul.mubr.bf16.gmra.mrb[0].mxu0 %v375
      %v526 = vpop.f32.mrb[0].mxu0
      %v527 = vadd.f32 %v317, %v526
      %v528 = vpop.f32.mrb[0].mxu0
      %v529 = vpop.f32.mrb[0].mxu0
      %v530 = vadd.f32 %v317, %v529
      %v531 = vpop.f32.mrb[0].mxu0
      %532 = vmatprep.mubr.bf16.mxu0 0
      %533 = vmatmul.mubr.bf16.gmra.mrb[0].mxu0 %v378
      %v534 = vpop.f32.mrb[0].mxu0
      %v535 = vadd.f32 %v317, %v534
      %v536 = vpop.f32.mrb[0].mxu0
      %v537 = vpop.f32.mrb[0].mxu0
      %v538 = vadd.f32 %v317, %v537
      %v539 = vpop.f32.mrb[0].mxu0
      %540 = vdwg.mxu0
      %v541 = vmax.f32 %v415, 0.0
      %v542 = vmax.f32 %v418, 0.0
      %v543 = vmax.f32 %v423, 0.0
      %v544 = vmax.f32 %v426, 0.0
      %v545 = vmax.f32 %v431, 0.0
      %v546 = vmax.f32 %v434, 0.0
      %v547 = vmax.f32 %v439, 0.0
      %v548 = vmax.f32 %v442, 0.0
      %v549 = vmax.f32 %v447, 0.0
      %v550 = vmax.f32 %v450, 0.0
      %v551 = vmax.f32 %v455, 0.0
      %v552 = vmax.f32 %v458, 0.0
      %v553 = vmax.f32 %v463, 0.0
      %v554 = vmax.f32 %v466, 0.0
      %v555 = vmax.f32 %v471, 0.0
      %v556 = vmax.f32 %v474, 0.0
      %v557 = vmax.f32 %v479, 0.0
      %v558 = vmax.f32 %v482, 0.0
      %v559 = vmax.f32 %v487, 0.0
      %v560 = vmax.f32 %v490, 0.0
      %v561 = vmax.f32 %v495, 0.0
      %v562 = vmax.f32 %v498, 0.0
      %v563 = vmax.f32 %v503, 0.0
      %v564 = vmax.f32 %v506, 0.0
      %v565 = vmax.f32 %v511, 0.0
      %v566 = vmax.f32 %v514, 0.0
      %v567 = vmax.f32 %v519, 0.0
      %v568 = vmax.f32 %v522, 0.0
      %v569 = vmax.f32 %v527, 0.0
      %v570 = vmax.f32 %v530, 0.0
      %v571 = vmax.f32 %v535, 0.0
      %v572 = vmax.f32 %v538, 0.0
      %v573 = vpack.c.bf16 %v542, %v541
      %v574 = vpack.c.bf16 %v544, %v543
      %v575 = vpack.c.bf16 %v546, %v545
      %v576 = vpack.c.bf16 %v548, %v547
      %v577 = vpack.c.bf16 %v550, %v549
      %v578 = vpack.c.bf16 %v552, %v551
      %v579 = vpack.c.bf16 %v554, %v553
      %v580 = vpack.c.bf16 %v556, %v555
      %v581 = vpack.c.bf16 %v558, %v557
      %v582 = vpack.c.bf16 %v560, %v559
      %v583 = vpack.c.bf16 %v562, %v561
      %v584 = vpack.c.bf16 %v564, %v563
      %v585 = vpack.c.bf16 %v566, %v565
      %v586 = vpack.c.bf16 %v568, %v567
      %v587 = vpack.c.bf16 %v570, %v569
      %v588 = vpack.c.bf16 %v572, %v571
      %v605 = vunpack.c.l.b16 %v573
      %v606 = vunpack.c.h.b16 %v573
      %v607 = vunpack.c.l.b16 %v574
      %v608 = vunpack.c.h.b16 %v574
      %v609 = vunpack.c.l.b16 %v575
      %v610 = vunpack.c.h.b16 %v575
      %v611 = vunpack.c.l.b16 %v576
      %v612 = vunpack.c.h.b16 %v576
      %v613 = vunpack.c.l.b16 %v577
      %v614 = vunpack.c.h.b16 %v577
      %v615 = vunpack.c.l.b16 %v578
      %v616 = vunpack.c.h.b16 %v578
      %v617 = vunpack.c.l.b16 %v579
      %v618 = vunpack.c.h.b16 %v579
      %v619 = vunpack.c.l.b16 %v580
      %v620 = vunpack.c.h.b16 %v580
      %v621 = vunpack.c.l.b16 %v581
      %v622 = vunpack.c.h.b16 %v581
      %v623 = vunpack.c.l.b16 %v582
      %v624 = vunpack.c.h.b16 %v582
      %v625 = vunpack.c.l.b16 %v583
      %v626 = vunpack.c.h.b16 %v583
      %v627 = vunpack.c.l.b16 %v584
      %v628 = vunpack.c.h.b16 %v584
      %v629 = vunpack.c.l.b16 %v585
      %v630 = vunpack.c.h.b16 %v585
      %v631 = vunpack.c.l.b16 %v586
      %v632 = vunpack.c.h.b16 %v586
      %v633 = vunpack.c.l.b16 %v587
      %v634 = vunpack.c.h.b16 %v587
      %v635 = vunpack.c.l.b16 %v588
      %v636 = vunpack.c.h.b16 %v588
      %v637 = vpack.c.b16 %v605, %v605
      %v638 = vpack.c.b16 %v606, %v606
      %v639 = vpack.c.b16 %v607, %v607
      %v640 = vpack.c.b16 %v608, %v608
      %v641 = vpack.c.b16 %v609, %v609
      %v642 = vpack.c.b16 %v610, %v610
      %v643 = vpack.c.b16 %v611, %v611
      %v644 = vpack.c.b16 %v612, %v612
      %v645 = vpack.c.b16 %v613, %v613
      %v646 = vpack.c.b16 %v614, %v614
      %v647 = vpack.c.b16 %v615, %v615
      %v648 = vpack.c.b16 %v616, %v616
      %v649 = vpack.c.b16 %v617, %v617
      %v650 = vpack.c.b16 %v618, %v618
      %v651 = vpack.c.b16 %v619, %v619
      %v652 = vpack.c.b16 %v620, %v620
      %v653 = vpack.c.b16 %v621, %v621
      %v654 = vpack.c.b16 %v622, %v622
      %v655 = vpack.c.b16 %v623, %v623
      %v656 = vpack.c.b16 %v624, %v624
      %v657 = vpack.c.b16 %v625, %v625
      %v658 = vpack.c.b16 %v626, %v626
      %v659 = vpack.c.b16 %v627, %v627
      %v660 = vpack.c.b16 %v628, %v628
      %v661 = vpack.c.b16 %v629, %v629
      %v662 = vpack.c.b16 %v630, %v630
      %v663 = vpack.c.b16 %v631, %v631
      %v664 = vpack.c.b16 %v632, %v632
      %v665 = vpack.c.b16 %v633, %v633
      %v666 = vpack.c.b16 %v634, %v634
      %v667 = vpack.c.b16 %v635, %v635
      %v668 = vpack.c.b16 %v636, %v636
      %vm701 = vcmask 257024
      %702 = vst.msk [vmem:[%s257] sm:$0xf] %vm701, %v637
      %703 = vst.msk [vmem:[%s257 + $0x4] sm:$0xf] %vm701, %v638
      %704 = vst.msk [vmem:[%s257 + $0x8] sm:$0xf] %vm701, %v639
      %705 = vst.msk [vmem:[%s257 + $0xc] sm:$0xf] %vm701, %v640
      %706 = vst.msk [vmem:[%s257 + $0x10] sm:$0xf] %vm701, %v641
      %707 = vst.msk [vmem:[%s257 + $0x14] sm:$0xf] %vm701, %v642
      %708 = vst.msk [vmem:[%s257 + $0x18] sm:$0xf] %vm701, %v643
      %709 = vst.msk [vmem:[%s257 + $0x1c] sm:$0xf] %vm701, %v644
      %710 = vst.msk [vmem:[%s257 + $0x20] sm:$0xf] %vm701, %v645
      %711 = vst.msk [vmem:[%s257 + $0x24] sm:$0xf] %vm701, %v646
      %712 = vst.msk [vmem:[%s257 + $0x28] sm:$0xf] %vm701, %v647
      %713 = vst.msk [vmem:[%s257 + $0x2c] sm:$0xf] %vm701, %v648
      %714 = vst.msk [vmem:[%s257 + $0x30] sm:$0xf] %vm701, %v649
      %715 = vst.msk [vmem:[%s257 + $0x34] sm:$0xf] %vm701, %v650
      %716 = vst.msk [vmem:[%s257 + $0x38] sm:$0xf] %vm701, %v651
      %717 = vst.msk [vmem:[%s257 + $0x3c] sm:$0xf] %vm701, %v652
      %718 = vst.msk [vmem:[%s257 + $0x40] sm:$0xf] %vm701, %v653
      %719 = vst.msk [vmem:[%s257 + $0x44] sm:$0xf] %vm701, %v654
      %720 = vst.msk [vmem:[%s257 + $0x48] sm:$0xf] %vm701, %v655
      %721 = vst.msk [vmem:[%s257 + $0x4c] sm:$0xf] %vm701, %v656
      %722 = vst.msk [vmem:[%s257 + $0x50] sm:$0xf] %vm701, %v657
      %723 = vst.msk [vmem:[%s257 + $0x54] sm:$0xf] %vm701, %v658
      %724 = vst.msk [vmem:[%s257 + $0x58] sm:$0xf] %vm701, %v659
      %725 = vst.msk [vmem:[%s257 + $0x5c] sm:$0xf] %vm701, %v660
      %726 = vst.msk [vmem:[%s257 + $0x60] sm:$0xf] %vm701, %v661
      %727 = vst.msk [vmem:[%s257 + $0x64] sm:$0xf] %vm701, %v662
      %728 = vst.msk [vmem:[%s257 + $0x68] sm:$0xf] %vm701, %v663
      %729 = vst.msk [vmem:[%s257 + $0x6c] sm:$0xf] %vm701, %v664
      %730 = vst.msk [vmem:[%s257 + $0x70] sm:$0xf] %vm701, %v665
      %731 = vst.msk [vmem:[%s257 + $0x74] sm:$0xf] %vm701, %v666
      %732 = vst.msk [vmem:[%s257 + $0x78] sm:$0xf] %vm701, %v667
      %733 = vst.msk [vmem:[%s257 + $0x7c] sm:$0xf] %vm701, %v668
      %s734 = smul.u32 32, %s19
      %p735 = scmp.lt.s32.totalorder %s734, 63
      %s736 = scalar_select %p735, %s734, 63
      %p737 = scmp.lt.s32.totalorder %s20, 0
      %s738 = scalar_select %p737, %s20, 0
      %s739 = sadd.s32 %s738, %s736
      %s740 = smul.addr %s739, 4
      %s741 = scalar_lea.vmem %s3, %s740
      // Predicated region
      $region33: #{fused_matmul.1} parent=31 // pred_check
        %p742 = pneg %p135
      $region34: #{fused_matmul.1} parent=31 // pred_check_branch
        %744 = sbr.rel (%p742) target = $region36
      $region35: #{fused_matmul.1} parent=31 // pred_region
        %s745 = smul.u32 32, %s19
      $region36: #{fused_matmul.1} parent=31 // pred_fallthru
        _
    $region32: #{fused_matmul.1} parent=5 // pred_fallthru
      _
    %p746 = scmp.le.s32.totalorder 2, %s9
    // Predicated region
    $region37: #{fused_matmul.1} parent=5 // pred_check
      %p747 = pneg %p746
    $region38: #{fused_matmul.1} parent=5 // pred_check_branch
      %749 = sbr.rel (%p747) target = $region40
    $region39: #{fused_matmul.1} parent=5 // pred_region
      %s750 = ssub.s32 %s9, 2
      // Predicated region
      $region41: #{fused_matmul.1} parent=39 // pred_check
        %p751 = pneg %p141
      $region42: #{fused_matmul.1} parent=39 // pred_check_branch
        %753 = sbr.rel (%p751) target = $region44
      $region43: #{fused_matmul.1} parent=39 // pred_region
        %s754 = smul.u32 32, %s22
        %p755 = scmp.lt.s32.totalorder %s754, 63
        %s756 = scalar_select %p755, %s754, 63
        %p757 = scmp.lt.s32.totalorder %s23, 0
        %s758 = scalar_select %p757, %s23, 0
        %s759 = sadd.s32 %s758, %s756
        %s760 = smul.addr %s759, 4
        %s761 = scalar_lea.vmem %s3, %s760
      $region44: #{fused_matmul.1} parent=39 // pred_fallthru
        _
    $region40: #{fused_matmul.1} parent=5 // pred_fallthru
      _
  $region6: #{fused_matmul.1} parent=0 // loop_footer
    %s13 = sadd.s32 1, %s9
  $region7: #{fused_matmul.1} parent=0 // loop_footer_branch
    %8 = sbr.rel target = $region3
  $region8: #{fused_matmul.1} parent=0 // loop_exit
    _

</llo_original>
